<compile_context>
chip_gen: v6e
topology: v6e:2x2x1
jax: 0.10.0
libtpu: 0.0.40
codegen_flags: <defaults>
</compile_context>

<pallas_src>
import math

import jax
import jax.numpy as jnp
from jax.experimental import pallas as pl
from jax.experimental.pallas import tpu as pltpu

_LANES = 512                          # lane-dense fold width (multiple of 128)
_MAX_NATURAL_LANES = 8192             # cap for using the natural trailing dim
_TARGET_TILE_BYTES = 4 * 1024 * 1024  # ~4 MiB blocks
_MAX_VMEM_BYTES = 48 * 1024 * 1024    # stays inside v7x's 64 MiB physical VMEM

# Integer dtypes we feed into the kernel natively (cast to f32 happens in VMEM).
_NATIVE_INT_DTYPES = (jnp.int8, jnp.uint8, jnp.int32, jnp.uint32)


def _normal_activation_kernel(params_ref, x_ref, o_ref):
    # params_ref lives in SMEM: [ca, cb, mean] (scalar reads are free vs. the
    # HBM stream).
    ca = params_ref[0]
    cb = params_ref[1]
    mean = params_ref[2]
    # Compute in f32 regardless of storage dtype (v5e VPU/EUP have no bf16,
    # and the kernel is HBM-bound anyway so narrower compute buys nothing).
    # exp -> EUP slot, muls -> VPU: plenty of slot slack.
    x = x_ref[...].astype(jnp.float32)
    d = x - mean
    o_ref[...] = (ca * jnp.exp(-(d * d) * cb)).astype(o_ref.dtype)


def _run_2d(x2d: jax.Array, params: jax.Array, out_dtype) -> jax.Array:
    """Runs the elementwise kernel over a 2D lane-dense view (no padding)."""
    rows, cols = x2d.shape
    in_size = jnp.dtype(x2d.dtype).itemsize
    out_size = jnp.dtype(out_dtype).itemsize
    # Sublane multiple for packed layouts (f32 -> 8, bf16 -> 16, int8 -> 32).
    sub = max(8, 32 // in_size, 32 // out_size)

    budget_rows = max(
        sub, (_TARGET_TILE_BYTES // (cols * max(in_size, out_size))) // sub * sub
    )
    if rows >= sub:
        tile_rows = min(budget_rows, (rows // sub) * sub)   # never exceeds rows
    else:
        tile_rows = rows                                     # block == full (tiny) extent
    # Ragged last block is handled with masked loads/stores -> no row padding.
    grid = (pl.cdiv(rows, tile_rows),)

    # Double-buffered input + output tiles, plus some headroom.
    footprint = 2 * tile_rows * cols * (in_size + out_size)
    vmem_limit = min(_MAX_VMEM_BYTES, max(footprint + footprint // 4, 8 << 20))

    return pl.pallas_call(
        _normal_activation_kernel,
        out_shape=jax.ShapeDtypeStruct((rows, cols), out_dtype),
        grid_spec=pltpu.PrefetchScalarGridSpec(
            num_scalar_prefetch=0,
            grid=grid,
            in_specs=[
                pl.BlockSpec(memory_space=pltpu.MemorySpace.SMEM),   # [ca, cb, mean]
                pl.BlockSpec((tile_rows, cols), lambda i: (i, 0)),
            ],
            out_specs=pl.BlockSpec((tile_rows, cols), lambda i: (i, 0)),
        ),
        compiler_params=pltpu.CompilerParams(
            # "parallel" lets the grid shard across v7x's two TensorCores so
            # both DMA engines drive HBM (verify with xprof; fall back to
            # pltpu.CORE_PARALLEL if only one TC is busy).
            dimension_semantics=("parallel",),
            vmem_limit_bytes=vmem_limit,
        ),
    )(params, x2d)


def normal_activation(data: jax.Array, stdev: float = 1.0, mean: float = 0.0) -> jax.Array:
    assert stdev > 0
    ca = 1.0 / (stdev * math.sqrt(2.0 * math.pi))
    cb = 1.0 / (2.0 * stdev ** 2)

    orig_shape = data.shape
    total = int(math.prod(orig_shape)) if orig_shape else 1

    if jnp.issubdtype(data.dtype, jnp.floating):
        out_dtype = data.dtype
    else:
        # PyTorch-like promotion: non-float inputs produce a float result.
        out_dtype = jnp.float32
        if not any(data.dtype == jnp.dtype(d) for d in _NATIVE_INT_DTYPES):
            # Exotic dtypes (bool, int16, ...): conservative wrapper-side cast.
            data = data.astype(jnp.float32)

    if total == 0:
        return jnp.zeros(orig_shape, dtype=out_dtype)

    # Scalar params live in SMEM -> distinct (stdev, mean) reuse the same compile.
    params = jnp.array([ca, cb, float(mean)], dtype=jnp.float32)

    # 1) Natural trailing dim already lane-dense: fold leading dims only
    #    (pure bitcast reshape, no refold / no copy risk).
    if (
        len(orig_shape) >= 2
        and orig_shape[-1] % 128 == 0
        and 0 < orig_shape[-1] <= _MAX_NATURAL_LANES
    ):
        cols = orig_shape[-1]
        out2d = _run_2d(data.reshape(total // cols, cols), params, out_dtype)
        return out2d.reshape(orig_shape)

    flat = data.reshape(-1)

    # 2) Flat size divides a lane-dense width: refold (still a bitcast reshape,
    #    no padding, no post-slice).
    for cols in (_LANES, 256, 128):
        if total % cols == 0:
            out2d = _run_2d(flat.reshape(total // cols, cols), params, out_dtype)
            return out2d.reshape(orig_shape)

    # 3) Ragged tail (< _LANES leftover elements): run the lane-dense body as-is
    #    and push only the tiny tail through a single padded row.  Pad/slice now
    #    touch fewer than _LANES elements, never the whole array.
    rows_full = total // _LANES
    rem = total - rows_full * _LANES
    pieces = []
    if rows_full:
        body = flat[: rows_full * _LANES].reshape(rows_full, _LANES)
        pieces.append(_run_2d(body, params, out_dtype).reshape(-1))
    tail = jnp.pad(flat[rows_full * _LANES:], (0, _LANES - rem)).reshape(1, _LANES)
    pieces.append(_run_2d(tail, params, out_dtype).reshape(-1)[:rem])
    out_flat = jnp.concatenate(pieces) if len(pieces) > 1 else pieces[0]
    return out_flat.reshape(orig_shape)


if __name__ == "__main__":
    key = jax.random.PRNGKey(0)
    # Small NCHW-like input consistent with a generic activation usage.
    x = jax.random.normal(key, (2, 4, 16, 16), dtype=jnp.float32)

    stdev, mean = 1.5, 0.25
    ca = 1.0 / (stdev * math.sqrt(2.0 * math.pi))
    cb = 1.0 / (2.0 * stdev ** 2)

    out = jax.block_until_ready(normal_activation(x, stdev=stdev, mean=mean))
    ref = ca * jnp.exp(-((x - mean) ** 2) * cb)
    assert out.shape == x.shape and out.dtype == x.dtype
    assert jnp.allclose(out, ref, atol=1e-6, rtol=1e-6)

    # Ragged size (1155 elements) -> exercises body + tiny-tail path (no whole-array pad).
    x2 = jax.random.normal(jax.random.PRNGKey(1), (3, 5, 7, 11), dtype=jnp.float32)
    out2 = jax.block_until_ready(normal_activation(x2, stdev=stdev, mean=mean))
    ref2 = ca * jnp.exp(-((x2 - mean) ** 2) * cb)
    assert jnp.allclose(out2, ref2, atol=1e-6, rtol=1e-6)

    # bf16 storage, f32 compute inside the kernel.
    x3 = x.astype(jnp.bfloat16)
    out3 = jax.block_until_ready(normal_activation(x3, stdev=stdev, mean=mean))
    ref3 = (ca * jnp.exp(-((x3.astype(jnp.float32) - mean) ** 2) * cb)).astype(jnp.bfloat16)
    assert out3.dtype == jnp.bfloat16
    assert jnp.allclose(out3.astype(jnp.float32), ref3.astype(jnp.float32), atol=1e-2, rtol=1e-2)

    # Integer input: fed natively, cast to f32 in VMEM, float32 result.
    x4 = jax.random.randint(jax.random.PRNGKey(2), (2, 4, 16, 16), -3, 4, dtype=jnp.int32)
    out4 = jax.block_until_ready(normal_activation(x4, stdev=stdev, mean=mean))
    ref4 = ca * jnp.exp(-((x4.astype(jnp.float32) - mean) ** 2) * cb)
    assert out4.dtype == jnp.float32
    assert jnp.allclose(out4, ref4, atol=1e-6, rtol=1e-6)

    # Different (stdev, mean) on the same shape -> reuses the compiled kernel
    # because the scalars flow through the SMEM operand, not the closure.
    out5 = jax.block_until_ready(normal_activation(x, stdev=0.7, mean=-1.0))
    ca5 = 1.0 / (0.7 * math.sqrt(2.0 * math.pi))
    cb5 = 1.0 / (2.0 * 0.7 ** 2)
    ref5 = ca5 * jnp.exp(-((x - (-1.0)) ** 2) * cb5)
    assert jnp.allclose(out5, ref5, atol=1e-6, rtol=1e-6)

    print("KERNEL_OK")
</pallas_src>

<mosaic_0001>
module attributes {stable_mosaic.version = 11 : i64} {
  func.func @_normal_activation_kernel(%arg0: i32, %arg1: memref<3xf32, #tpu.memory_space<smem>>, %arg2: memref<4x512xf32, #tpu.memory_space<vmem>>, %arg3: memref<4x512xf32, #tpu.memory_space<vmem>>) attributes {dimension_semantics = [#tpu.dimension_semantics<parallel>], iteration_bounds = array<i64: 1>, scalar_prefetch = 0 : i64, scratch_operands = 0 : i64, tpu.core_type = #tpu.core_type<tc>, window_params = [{transform_indices = @transform_0, window_bounds = array<i64: 3>}, {transform_indices = @transform_1, window_bounds = array<i64: 4, 512>}, {transform_indices = @transform_2, window_bounds = array<i64: 4, 512>}]} {
    %c0 = arith.constant 0 : index
    %0 = memref.load %arg1[%c0] : memref<3xf32, #tpu.memory_space<smem>>
    %c1 = arith.constant 1 : index
    %1 = memref.load %arg1[%c1] : memref<3xf32, #tpu.memory_space<smem>>
    %c2 = arith.constant 2 : index
    %2 = memref.load %arg1[%c2] : memref<3xf32, #tpu.memory_space<smem>>
    %c0_0 = arith.constant 0 : index
    %c0_1 = arith.constant 0 : index
    %3 = vector.load %arg2[%c0_0, %c0_1] : memref<4x512xf32, #tpu.memory_space<vmem>>, vector<4x512xf32>
    %4 = vector.broadcast %2 : f32 to vector<4x512xf32>
    %5 = arith.subf %3, %4 : vector<4x512xf32>
    %6 = arith.mulf %5, %5 : vector<4x512xf32>
    %cst = arith.constant 0.000000e+00 : f32
    %7 = vector.broadcast %cst : f32 to vector<4x512xf32>
    %8 = arith.subf %7, %6 : vector<4x512xf32>
    %9 = vector.broadcast %1 : f32 to vector<4x512xf32>
    %10 = arith.mulf %8, %9 : vector<4x512xf32>
    %11 = math.exp %10 : vector<4x512xf32>
    %12 = vector.broadcast %0 : f32 to vector<4x512xf32>
    %13 = arith.mulf %12, %11 : vector<4x512xf32>
    %c0_2 = arith.constant 0 : index
    %c0_3 = arith.constant 0 : index
    %14 = vector.load %arg3[%c0_2, %c0_3] : memref<4x512xf32, #tpu.memory_space<vmem>>, vector<4x512xf32>
    tpu.vector_store %arg3[%c0_2, %c0_3], %13 {strides = array<i32>} : memref<4x512xf32, #tpu.memory_space<vmem>>, vector<4x512xf32>,
    return
  }
  func.func @transform_0(%arg0: i32) -> i32 {
    %c0_i32 = arith.constant 0 : i32
    %c0_i32_0 = arith.constant 0 : i32
    return %c0_i32 : i32
  }
  func.func @transform_1(%arg0: i32) -> (i32, i32) {
    %c0_i32 = arith.constant 0 : i32
    %c0_i32_0 = arith.constant 0 : i32
    return %arg0, %c0_i32 : i32, i32
  }
  func.func @transform_2(%arg0: i32) -> (i32, i32) {
    %c0_i32 = arith.constant 0 : i32
    %c0_i32_0 = arith.constant 0 : i32
    return %arg0, %c0_i32 : i32, i32
  }
}

</mosaic_0001>

<llo_original>
// kernel: tpu_custom_call.1
$region0: #{tpu_custom_call.1}
  #allocation0 [shape = 'u32[]', space=smem, size = 0x4, offset = 0x4, fixed_abs, tag = 'smem constant byte address 0x4 - core index']
  #allocation1 [shape = 'u32[144,128]{1,0:T(1,128)}', space=vmem, size = 0x12000, scoped, tag = 'internal scratch']
  %s0 = inlined_call_operand.hbm [shape: f32[3], index: 0, kind: input, shape index: {}]
  %s1 = inlined_call_operand.hbm [shape: f32[4,512], index: 1, kind: input, shape index: {}]
  %s2 = inlined_call_operand.hbm [shape: f32[4,512], index: 2, kind: output, shape index: {}]
  %s3 = sld [smem:[#allocation0]]
  $region26: #{tpu_custom_call.1} parent=0
    _
  %s5 = ssub.s32 1, %s3
  %s6 = scalar_select 0, %s5, %s3
  $region1: #{tpu_custom_call.1} parent=0
    #allocation2 [shape = 'u8[512]{0}', space=smem, size = 0x200, scoped, tag = 'input window, operand 0, single buffered']
    #allocation3 [shape = 's32[1]{0}', space=sflag, size = 0x4, scoped, tag = 'scoped memory for tpu_custom_call.1']
    #allocation4 [shape = 's32[1]{0}', space=sflag, size = 0x4, scoped, tag = 'scoped memory for tpu_custom_call.1']
    #allocation5 [shape = 's32[1]{0}', space=sflag, size = 0x4, scoped, tag = 'scoped memory for tpu_custom_call.1']
    #allocation6 [shape = 'u8[8192]{0}', space=vmem, size = 0x2000, scoped, tag = 'input window, operand 1, single buffered']
    #allocation7 [shape = 'u8[8192]{0}', space=vmem, size = 0x2000, scoped, tag = 'output window, operand 0, single buffered']
    %7 = vsyncpa [#allocation5], 0
    %8 = vsyncpa [#allocation3], 0
    %9 = vsyncpa [#allocation4], 0
    // Predicated region
    $region2: #{tpu_custom_call.1} parent=1 // pred_check
      _
    $region3: #{tpu_custom_call.1} parent=1 // pred_check_branch
      %11 = sbr.rel (0) target = $region5
    $region4: #{tpu_custom_call.1} parent=1 // pred_region
      %s13 = ssub.s32 16, 16
      %14 = vsyncadd [#allocation5], %s13
      %17 = dma.hbm_to_smem %s0, 16, [#allocation2], [#allocation5]
    $region5: #{tpu_custom_call.1} parent=1 // pred_fallthru
      _
    // Predicated region
    $region6: #{tpu_custom_call.1} parent=1 // pred_check
      _
    $region7: #{tpu_custom_call.1} parent=1 // pred_check_branch
      %19 = sbr.rel (0) target = $region9
    $region8: #{tpu_custom_call.1} parent=1 // pred_region
      %s21 = ssub.s32 256, 256
      %22 = vsyncadd [#allocation3], %s21
      %s24 = sshll.u32 [#allocation6], 4
      %s25 = int_to_ptr.vmem [resolvable:$true] %s24
      %27 = dma.hbm_to_vmem [thread:$0]  %s1, 256, %s25, [#allocation3]
    $region9: #{tpu_custom_call.1} parent=1 // pred_fallthru
      _
    // Predicated region
    $region10: #{tpu_custom_call.1} parent=1 // pred_check
      _
    $region11: #{tpu_custom_call.1} parent=1 // pred_check_branch
      %29 = sbr.rel (0) target = $region13
    $region12: #{tpu_custom_call.1} parent=1 // pred_region
      %30 = dma.done [#allocation5], 16
    $region13: #{tpu_custom_call.1} parent=1 // pred_fallthru
      _
    // Predicated region
    $region14: #{tpu_custom_call.1} parent=1 // pred_check
      _
    $region15: #{tpu_custom_call.1} parent=1 // pred_check_branch
      %32 = sbr.rel (0) target = $region17
    $region16: #{tpu_custom_call.1} parent=1 // pred_region
      %33 = dma.done [#allocation3], 256
    $region17: #{tpu_custom_call.1} parent=1 // pred_fallthru
      _
    %34 = sfence
    %s35 = sld [smem:[#allocation2]]
    %s36 = sld [smem:[#allocation2 + $0x1]]
    %s37 = sld [smem:[#allocation2 + $0x2]]
    %v38 = vld [vmem:[#allocation6] sm:$0xff]
    %v39 = vld [vmem:[#allocation6 + $0x8] sm:$0xff]
    %v40 = vstv %s37
    %v41 = vsub.f32 %v38, %v40
    %v42 = vsub.f32 %v39, %v40
    %v43 = vmul.f32 %v41, %v41
    %v44 = vmul.f32 %v42, %v42
    %v45 = vsub.f32 0.0, %v43
    %v46 = vsub.f32 0.0, %v44
    %v47 = vstv %s36
    %v48 = vmul.f32 %v45, %v47
    %v49 = vmul.f32 %v46, %v47
    %v50 = vmul.f32 %v48, 1.442695
    %v51 = vpow.pop %v50
    %v52 = vmul.f32 %v49, 1.442695
    %v53 = vpow.pop %v52
    %v54 = vstv %s35
    %v55 = vmul.f32 %v54, %v51
    %v56 = vmul.f32 %v54, %v53
    %57 = vst [vmem:[#allocation7] sm:$0xff] %v55
    %58 = vst [vmem:[#allocation7 + $0x8] sm:$0xff] %v56
    // Predicated region
    $region18: #{tpu_custom_call.1} parent=1 // pred_check
      _
    $region19: #{tpu_custom_call.1} parent=1 // pred_check_branch
      %60 = sbr.rel (0) target = $region21
    $region20: #{tpu_custom_call.1} parent=1 // pred_region
      %s62 = ssub.s32 256, 256
      %63 = vsyncadd [#allocation4], %s62
      %s65 = sshll.u32 [#allocation7], 4
      %s66 = int_to_ptr.vmem [resolvable:$true] %s65
      %68 = dma.vmem_to_hbm [thread:$0]  %s66, 256, %s2, [#allocation4]
    $region21: #{tpu_custom_call.1} parent=1 // pred_fallthru
      _
    // Predicated region
    $region22: #{tpu_custom_call.1} parent=1 // pred_check
      _
    $region23: #{tpu_custom_call.1} parent=1 // pred_check_branch
      %70 = sbr.rel (0) target = $region25
    $region24: #{tpu_custom_call.1} parent=1 // pred_region
      %71 = dma.done [#allocation4], 256
    $region25: #{tpu_custom_call.1} parent=1 // pred_fallthru
      _
    %72 = vsyncpa [#allocation3], 1
    %73 = vsyncpa [#allocation4], 1
    %74 = vsyncpa [#allocation5], 1

</llo_original>
